<compile_context>
chip_gen: v6e
topology: v6e:2x2x1
jax: 0.10.0
libtpu: 0.0.40
codegen_flags: <defaults>
</compile_context>

<pallas_src>
import jax
import jax.numpy as jnp
from jax.experimental import pallas as pl
from jax.experimental.pallas import tpu as pltpu
import numpy as np

# Feature segmentation as in the PyTorch SENet (input dim = 154).
SEGMENTS = [(0, 50), (50, 56), (56, 77), (77, 127), (127, 133), (133, 154)]
FEAT_DIM = 154
N_SEG = len(SEGMENTS)
HIDDEN = 2        # SENet bottleneck width (fc1: 6->2, fc2: 2->6)
HID_PAD = 8       # zero-padded hidden/segment width used inside the kernel


def _round_up(n, m):
    return ((n + m - 1) // m) * m


def _pick_tile(B, block_rows):
    """Batch tile: >= 4 grid steps when B is large (>= 2 per TC on v7x megacore),
    else one full-batch block; always a multiple of 8 sublanes."""
    target = _round_up(max(1, pl.cdiv(B, 4)), 8)
    tb = max(8, min(block_rows, target))
    return min(tb, _round_up(B, 8))


def senet_kernel(x_ref, m1_ref, b1_ref, w2_ref, b2_ref, sel_ref, o_ref):
    x = x_ref[...].astype(jnp.float32)                                    # (TB, 154)

    # excitation: (segment means + fc1) folded into M1, relu -> (TB, 8) (cols 2..7 dead)
    h = jnp.dot(x, m1_ref[...], preferred_element_type=jnp.float32) + b1_ref[...]
    h = jnp.maximum(h, 0.0)

    # fc2 + sigmoid at narrow width -> (TB, 8); cols 6..7 give 0.5 but are killed by sel
    s = jax.nn.sigmoid(
        jnp.dot(h, w2_ref[...], preferred_element_type=jnp.float32) + b2_ref[...])

    # broadcast per-segment gates to all 154 features on the MXU (exact: disjoint 0/1 rows)
    gate = jnp.dot(s, sel_ref[...], preferred_element_type=jnp.float32)   # (TB, 154)

    o_ref[...] = (x * gate).astype(o_ref.dtype)


def senet_forward(x, folded_params, *, block_rows=4096, io_dtype=None, alias_input=False):
    """x: (B, 154). Returns (B, 154) in x's (possibly cast) dtype."""
    m1, b1, w2, b2, sel = folded_params
    B, F = x.shape
    assert F == FEAT_DIM

    if io_dtype is not None and x.dtype != io_dtype:
        x = x.astype(io_dtype)
    out_dtype = x.dtype

    tb = _pick_tile(B, block_rows)
    grid = (pl.cdiv(B, tb),)

    cost = pl.CostEstimate(
        flops=int(4 * B * FEAT_DIM * HID_PAD + 4 * B * FEAT_DIM),
        transcendentals=int(B * HID_PAD),
        bytes_accessed=int(2 * B * FEAT_DIM * jnp.dtype(out_dtype).itemsize),
    )

    extra = {"input_output_aliases": {0: 0}} if alias_input else {}

    return pl.pallas_call(
        senet_kernel,
        out_shape=jax.ShapeDtypeStruct((B, FEAT_DIM), out_dtype),
        grid=grid,
        in_specs=[
            pl.BlockSpec((tb, FEAT_DIM), lambda i: (i, 0)),         # x: batch-tiled
            pl.BlockSpec((FEAT_DIM, HID_PAD), lambda i: (0, 0)),    # M1: resident
            pl.BlockSpec((1, HID_PAD), lambda i: (0, 0)),           # b1: resident
            pl.BlockSpec((HID_PAD, HID_PAD), lambda i: (0, 0)),     # W2: resident
            pl.BlockSpec((1, HID_PAD), lambda i: (0, 0)),           # b2: resident
            pl.BlockSpec((HID_PAD, FEAT_DIM), lambda i: (0, 0)),    # selector: resident
        ],
        out_specs=pl.BlockSpec((tb, FEAT_DIM), lambda i: (i, 0)),
        compiler_params=pltpu.CompilerParams(
            dimension_semantics=("parallel",),
        ),
        cost_estimate=cost,
        **extra,
    )(x, m1, b1, w2, b2, sel)


def make_raw_params(key):
    """Deterministic parameter init (mirrors nn.Linear default uniform init)."""
    k1, k2, k3, k4 = jax.random.split(key, 4)

    bound1 = 1.0 / np.sqrt(6.0)
    w1 = jax.random.uniform(k1, (6, 2), jnp.float32, -bound1, bound1)   # fc1 (transposed)
    b1 = jax.random.uniform(k2, (1, 2), jnp.float32, -bound1, bound1)

    bound2 = 1.0 / np.sqrt(2.0)
    w2 = jax.random.uniform(k3, (2, 6), jnp.float32, -bound2, bound2)   # fc2 (transposed)
    b2 = jax.random.uniform(k4, (1, 6), jnp.float32, -bound2, bound2)
    return w1, b1, w2, b2


def fold_params(raw_params):
    """Pre-fold segment means into fc1 and build the narrow-width fc2 + gate selector."""
    w1, b1, w2, b2 = (np.asarray(p, np.float32) for p in raw_params)

    s_mean = np.zeros((FEAT_DIM, N_SEG), np.float32)    # segment-mean selector
    sel = np.zeros((HID_PAD, FEAT_DIM), np.float32)     # gate-broadcast selector (rows 6,7 = 0)
    for s, (lo, hi) in enumerate(SEGMENTS):
        s_mean[lo:hi, s] = 1.0 / (hi - lo)
        sel[s, lo:hi] = 1.0

    m1 = np.zeros((FEAT_DIM, HID_PAD), np.float32)
    m1[:, :HIDDEN] = s_mean @ w1                        # (154, 2)

    b1p = np.zeros((1, HID_PAD), np.float32)
    b1p[:, :HIDDEN] = b1

    w2p = np.zeros((HID_PAD, HID_PAD), np.float32)
    w2p[:HIDDEN, :N_SEG] = w2                           # (2, 6)

    b2p = np.zeros((1, HID_PAD), np.float32)
    b2p[:, :N_SEG] = b2

    return tuple(jnp.asarray(a) for a in (m1, b1p, w2p, b2p, sel))


def senet_reference(x, raw_params):
    """Pure-JAX reference reproducing the PyTorch SENet forward (eval mode)."""
    w1, b1, w2, b2 = raw_params
    means = jnp.stack(
        [jnp.mean(x[:, lo:hi], axis=1) for (lo, hi) in SEGMENTS], axis=1)   # (B, 6)
    h = jnp.maximum(means @ w1 + b1, 0.0)
    se = jax.nn.sigmoid(h @ w2 + b2)                                        # (B, 6)
    pieces = [se[:, s:s + 1] * x[:, lo:hi] for s, (lo, hi) in enumerate(SEGMENTS)]
    return jnp.concatenate(pieces, axis=1)


if __name__ == "__main__":
    key = jax.random.PRNGKey(0)
    kx, kp = jax.random.split(key)

    B = 8
    x = jax.random.normal(kx, (B, FEAT_DIM), jnp.float32)
    raw = make_raw_params(kp)
    folded = fold_params(raw)

    out = senet_forward(x, folded)
    out = jax.block_until_ready(out)

    ref = senet_reference(x, raw)
    np.testing.assert_allclose(np.asarray(out), np.asarray(ref), rtol=1e-5, atol=1e-5)

    print("KERNEL_OK")
</pallas_src>

<mosaic_0001>
module attributes {stable_mosaic.version = 11 : i64} {
  func.func @senet_kernel(%arg0: i32, %arg1: memref<8x154xf32, #tpu.memory_space<vmem>>, %arg2: memref<154x8xf32, #tpu.memory_space<vmem>>, %arg3: memref<1x8xf32, #tpu.memory_space<vmem>>, %arg4: memref<8x8xf32, #tpu.memory_space<vmem>>, %arg5: memref<1x8xf32, #tpu.memory_space<vmem>>, %arg6: memref<8x154xf32, #tpu.memory_space<vmem>>, %arg7: memref<8x154xf32, #tpu.memory_space<vmem>>) attributes {dimension_semantics = [#tpu.dimension_semantics<parallel>], iteration_bounds = array<i64: 1>, scalar_prefetch = 0 : i64, scratch_operands = 0 : i64, tpu.core_type = #tpu.core_type<tc>, window_params = [{transform_indices = @transform_0, window_bounds = array<i64: 8, 154>}, {pipeline_mode = #tpu.pipeline_mode<synchronous>, transform_indices = @transform_1, window_bounds = array<i64: 154, 8>}, {pipeline_mode = #tpu.pipeline_mode<synchronous>, transform_indices = @transform_2, window_bounds = array<i64: 1, 8>}, {pipeline_mode = #tpu.pipeline_mode<synchronous>, transform_indices = @transform_3, window_bounds = array<i64: 8, 8>}, {pipeline_mode = #tpu.pipeline_mode<synchronous>, transform_indices = @transform_4, window_bounds = array<i64: 1, 8>}, {pipeline_mode = #tpu.pipeline_mode<synchronous>, transform_indices = @transform_5, window_bounds = array<i64: 8, 154>}, {transform_indices = @transform_6, window_bounds = array<i64: 8, 154>}]} {
    %c0 = arith.constant 0 : index
    %c0_0 = arith.constant 0 : index
    %0 = vector.load %arg1[%c0, %c0_0] : memref<8x154xf32, #tpu.memory_space<vmem>>, vector<8x154xf32>
    %c0_1 = arith.constant 0 : index
    %c0_2 = arith.constant 0 : index
    %1 = vector.load %arg2[%c0_1, %c0_2] : memref<154x8xf32, #tpu.memory_space<vmem>>, vector<154x8xf32>
    %cst = arith.constant dense<0.000000e+00> : vector<8x8xf32>
    %2 = tpu.matmul %0, %1, %cst {dimension_numbers = #tpu.dot_dimension_numbers<[1], [0], [0], [1], [0, 0, 1, 1], [], []>} : vector<8x154xf32>, vector<154x8xf32>, vector<8x8xf32> -> vector<8x8xf32>
    %c0_3 = arith.constant 0 : index
    %c0_4 = arith.constant 0 : index
    %3 = vector.load %arg3[%c0_3, %c0_4] : memref<1x8xf32, #tpu.memory_space<vmem>>, vector<1x8xf32>
    %4 = vector.broadcast %3 : vector<1x8xf32> to vector<8x8xf32>
    %5 = arith.addf %2, %4 : vector<8x8xf32>
    %cst_5 = arith.constant 0.000000e+00 : f32
    %6 = vector.broadcast %cst_5 : f32 to vector<8x8xf32>
    %7 = arith.maximumf %5, %6 : vector<8x8xf32>
    %c0_6 = arith.constant 0 : index
    %c0_7 = arith.constant 0 : index
    %8 = vector.load %arg4[%c0_6, %c0_7] : memref<8x8xf32, #tpu.memory_space<vmem>>, vector<8x8xf32>
    %cst_8 = arith.constant dense<0.000000e+00> : vector<8x8xf32>
    %9 = tpu.matmul %7, %8, %cst_8 {dimension_numbers = #tpu.dot_dimension_numbers<[1], [0], [0], [1], [0, 0, 1, 1], [], []>} : vector<8x8xf32>, vector<8x8xf32>, vector<8x8xf32> -> vector<8x8xf32>
    %c0_9 = arith.constant 0 : index
    %c0_10 = arith.constant 0 : index
    %10 = vector.load %arg5[%c0_9, %c0_10] : memref<1x8xf32, #tpu.memory_space<vmem>>, vector<1x8xf32>
    %11 = vector.broadcast %10 : vector<1x8xf32> to vector<8x8xf32>
    %12 = arith.addf %9, %11 : vector<8x8xf32>
    %13 = arith.negf %12 : vector<8x8xf32>
    %14 = math.exp %13 : vector<8x8xf32>
    %cst_11 = arith.constant 1.000000e+00 : f32
    %15 = vector.broadcast %cst_11 : f32 to vector<8x8xf32>
    %16 = arith.addf %15, %14 : vector<8x8xf32>
    %17 = arith.divf %15, %16 : vector<8x8xf32>
    %c0_12 = arith.constant 0 : index
    %c0_13 = arith.constant 0 : index
    %18 = vector.load %arg6[%c0_12, %c0_13] : memref<8x154xf32, #tpu.memory_space<vmem>>, vector<8x154xf32>
    %cst_14 = arith.constant dense<0.000000e+00> : vector<8x154xf32>
    %19 = tpu.matmul %17, %18, %cst_14 {dimension_numbers = #tpu.dot_dimension_numbers<[1], [0], [0], [1], [0, 0, 1, 1], [], []>} : vector<8x8xf32>, vector<8x154xf32>, vector<8x154xf32> -> vector<8x154xf32>
    %20 = arith.mulf %0, %19 : vector<8x154xf32>
    %c0_15 = arith.constant 0 : index
    %c0_16 = arith.constant 0 : index
    %21 = vector.load %arg7[%c0_15, %c0_16] : memref<8x154xf32, #tpu.memory_space<vmem>>, vector<8x154xf32>
    tpu.vector_store %arg7[%c0_15, %c0_16], %20 {strides = array<i32>} : memref<8x154xf32, #tpu.memory_space<vmem>>, vector<8x154xf32>,
    return
  }
  func.func @transform_0(%arg0: i32) -> (i32, i32) {
    %c0_i32 = arith.constant 0 : i32
    %c0_i32_0 = arith.constant 0 : i32
    return %arg0, %c0_i32 : i32, i32
  }
  func.func @transform_1(%arg0: i32) -> (i32, i32) {
    %c0_i32 = arith.constant 0 : i32
    %c0_i32_0 = arith.constant 0 : i32
    %c0_i32_1 = arith.constant 0 : i32
    return %c0_i32, %c0_i32_0 : i32, i32
  }
  func.func @transform_2(%arg0: i32) -> (i32, i32) {
    %c0_i32 = arith.constant 0 : i32
    %c0_i32_0 = arith.constant 0 : i32
    %c0_i32_1 = arith.constant 0 : i32
    return %c0_i32, %c0_i32_0 : i32, i32
  }
  func.func @transform_3(%arg0: i32) -> (i32, i32) {
    %c0_i32 = arith.constant 0 : i32
    %c0_i32_0 = arith.constant 0 : i32
    %c0_i32_1 = arith.constant 0 : i32
    return %c0_i32, %c0_i32_0 : i32, i32
  }
  func.func @transform_4(%arg0: i32) -> (i32, i32) {
    %c0_i32 = arith.constant 0 : i32
    %c0_i32_0 = arith.constant 0 : i32
    %c0_i32_1 = arith.constant 0 : i32
    return %c0_i32, %c0_i32_0 : i32, i32
  }
  func.func @transform_5(%arg0: i32) -> (i32, i32) {
    %c0_i32 = arith.constant 0 : i32
    %c0_i32_0 = arith.constant 0 : i32
    %c0_i32_1 = arith.constant 0 : i32
    return %c0_i32, %c0_i32_0 : i32, i32
  }
  func.func @transform_6(%arg0: i32) -> (i32, i32) {
    %c0_i32 = arith.constant 0 : i32
    %c0_i32_0 = arith.constant 0 : i32
    return %arg0, %c0_i32 : i32, i32
  }
}

</mosaic_0001>

<llo_original>
// kernel: tpu_custom_call.1
$region0: #{tpu_custom_call.1}
  #allocation0 [shape = 'u32[]', space=smem, size = 0x4, offset = 0x4, fixed_abs, tag = 'smem constant byte address 0x4 - core index']
  #allocation1 [shape = 'u32[144,128]{1,0:T(1,128)}', space=vmem, size = 0x12000, scoped, tag = 'internal scratch']
  %s0 = inlined_call_operand.vmem [shape: f32[8,154], index: 0, kind: input, shape index: {}]
  %s1 = inlined_call_operand.vmem [shape: f32[154,8], index: 1, kind: input, shape index: {}]
  %s2 = inlined_call_operand.vmem [shape: f32[1,8], index: 2, kind: input, shape index: {}]
  %s3 = inlined_call_operand.vmem [shape: f32[8,8], index: 3, kind: input, shape index: {}]
  %s4 = inlined_call_operand.vmem [shape: f32[1,8], index: 4, kind: input, shape index: {}]
  %s5 = inlined_call_operand.vmem [shape: f32[8,154], index: 5, kind: input, shape index: {}]
  %s6 = inlined_call_operand.hbm [shape: f32[8,154], index: 6, kind: output, shape index: {}]
  %s7 = sld [smem:[#allocation0]]
  $region34: #{tpu_custom_call.1} parent=0
    _
  %s9 = ssub.s32 1, %s7
  %s10 = scalar_select 0, %s9, %s7
  $region1: #{tpu_custom_call.1} parent=0
    #allocation2 [shape = 'u8[8192]{0}', space=vmem, size = 0x2000, scoped, tag = 'output window, operand 0, single buffered']
    #allocation3 [shape = 's32[1]{0}', space=sflag, size = 0x4, scoped, tag = 'scoped memory for tpu_custom_call.1']
    %11 = vsyncpa [#allocation3], 0
    // Predicated region
    $region2: #{tpu_custom_call.1} parent=1 // pred_check
      _
    $region3: #{tpu_custom_call.1} parent=1 // pred_check_branch
      %13 = sbr.rel (0) target = $region5
    $region4: #{tpu_custom_call.1} parent=1 // pred_region
      _
    $region5: #{tpu_custom_call.1} parent=1 // pred_fallthru
      _
    // Predicated region
    $region6: #{tpu_custom_call.1} parent=1 // pred_check
      _
    $region7: #{tpu_custom_call.1} parent=1 // pred_check_branch
      %15 = sbr.rel (0) target = $region9
    $region8: #{tpu_custom_call.1} parent=1 // pred_region
      _
    $region9: #{tpu_custom_call.1} parent=1 // pred_fallthru
      _
    // Predicated region
    $region10: #{tpu_custom_call.1} parent=1 // pred_check
      _
    $region11: #{tpu_custom_call.1} parent=1 // pred_check_branch
      %17 = sbr.rel (0) target = $region13
    $region12: #{tpu_custom_call.1} parent=1 // pred_region
      _
    $region13: #{tpu_custom_call.1} parent=1 // pred_fallthru
      _
    // Predicated region
    $region14: #{tpu_custom_call.1} parent=1 // pred_check
      _
    $region15: #{tpu_custom_call.1} parent=1 // pred_check_branch
      %19 = sbr.rel (0) target = $region17
    $region16: #{tpu_custom_call.1} parent=1 // pred_region
      _
    $region17: #{tpu_custom_call.1} parent=1 // pred_fallthru
      _
    // Predicated region
    $region18: #{tpu_custom_call.1} parent=1 // pred_check
      _
    $region19: #{tpu_custom_call.1} parent=1 // pred_check_branch
      %21 = sbr.rel (0) target = $region21
    $region20: #{tpu_custom_call.1} parent=1 // pred_region
      _
    $region21: #{tpu_custom_call.1} parent=1 // pred_fallthru
      _
    // Predicated region
    $region22: #{tpu_custom_call.1} parent=1 // pred_check
      _
    $region23: #{tpu_custom_call.1} parent=1 // pred_check_branch
      %23 = sbr.rel (0) target = $region25
    $region24: #{tpu_custom_call.1} parent=1 // pred_region
      _
    $region25: #{tpu_custom_call.1} parent=1 // pred_fallthru
      _
    %v24 = vld [vmem:[%s0] sm:$0xff]
    %v25 = vld [vmem:[%s0 + $0x8] sm:$0xff]
    %v26 = vld [vmem:[%s1] sm:$0xff]
    %v27 = vld [vmem:[%s1 + $0x8] sm:$0xff]
    %v28 = vld [vmem:[%s1 + $0x10] sm:$0xff]
    %v29 = vld [vmem:[%s1 + $0x18] sm:$0xff]
    %v30 = vld [vmem:[%s1 + $0x20] sm:$0xff]
    %v31 = vld [vmem:[%s1 + $0x28] sm:$0xff]
    %v32 = vld [vmem:[%s1 + $0x30] sm:$0xff]
    %v33 = vld [vmem:[%s1 + $0x38] sm:$0xff]
    %v34 = vld [vmem:[%s1 + $0x40] sm:$0xff]
    %v35 = vld [vmem:[%s1 + $0x48] sm:$0xff]
    %v36 = vld [vmem:[%s1 + $0x50] sm:$0xff]
    %v37 = vld [vmem:[%s1 + $0x58] sm:$0xff]
    %v38 = vld [vmem:[%s1 + $0x60] sm:$0xff]
    %v39 = vld [vmem:[%s1 + $0x68] sm:$0xff]
    %v40 = vld [vmem:[%s1 + $0x70] sm:$0xff]
    %v41 = vld [vmem:[%s1 + $0x78] sm:$0xff]
    %v42 = vld [vmem:[%s1 + $0x80] sm:$0xff]
    %v43 = vld [vmem:[%s1 + $0x88] sm:$0xff]
    %v44 = vld [vmem:[%s1 + $0x90] sm:$0xff]
    %v45 = vld [vmem:[%s1 + $0x98] sm:$0x3]
    %v46 = vld [vmem:[%s2] sm:$0x1]
    %v48 = vlaneseq
    %v49 = vshrl.u32 %v48, 7
    %v50 = vsub.s32 0, %v49
    %v51 = vrot.slane %v46, %v50
    %vm53 = vcmask 211968
    %v55 = vsel %vm53, %v25, 0
    %vm57 = vcmask 1041408
    %v59 = vsel %vm57, %v45, 0
    %61 = vmatprep.subr.mxu0 0.0
    %62 = vmatpush1.msra.mxu0 %v41
    %63 = vmatprep.subr.mxu0 0.0
    %64 = vmatpush1.msra.mxu0 %v40
    %65 = vmatprep.subr.mxu0 0.0
    %66 = vmatpush1.msra.mxu0 %v39
    %67 = vmatprep.subr.mxu0 0.0
    %68 = vmatpush1.msra.mxu0 %v38
    %69 = vmatprep.subr.mxu0 0.0
    %70 = vmatpush1.msra.mxu0 %v37
    %71 = vmatprep.subr.mxu0 0.0
    %72 = vmatpush1.msra.mxu0 %v36
    %73 = vmatprep.subr.mxu0 0.0
    %74 = vmatpush1.msra.mxu0 %v35
    %75 = vmatprep.subr.mxu0 0.0
    %76 = vmatpush1.msra.mxu0 %v34
    %77 = vmatprep.subr.mxu0 0.0
    %78 = vmatpush1.msra.mxu0 %v33
    %79 = vmatprep.subr.mxu0 0.0
    %80 = vmatpush1.msra.mxu0 %v32
    %81 = vmatprep.subr.mxu0 0.0
    %82 = vmatpush1.msra.mxu0 %v31
    %83 = vmatprep.subr.mxu0 0.0
    %84 = vmatpush1.msra.mxu0 %v30
    %85 = vmatprep.subr.mxu0 0.0
    %86 = vmatpush1.msra.mxu0 %v29
    %87 = vmatprep.subr.mxu0 0.0
    %88 = vmatpush1.msra.mxu0 %v28
    %89 = vmatprep.subr.mxu0 0.0
    %90 = vmatpush1.msra.mxu0 %v27
    %91 = vmatprep.subr.mxu0 0.0
    %92 = vmatpush1.msra.mxu0 %v26
    %93 = vmatprep.subr.mxu0 0.0
    %94 = vmatpush2.msra.mxu0 0.0
    %95 = vmatprep.subr.mxu0 0.0
    %96 = vmatpush2.msra.mxu0 0.0
    %97 = vmatprep.subr.mxu0 0.0
    %98 = vmatpush2.msra.mxu0 0.0
    %99 = vmatprep.subr.mxu0 0.0
    %100 = vmatpush2.msra.mxu0 0.0
    %101 = vmatprep.subr.mxu0 0.0
    %102 = vmatpush2.msra.mxu0 0.0
    %103 = vmatprep.subr.mxu0 0.0
    %104 = vmatpush2.msra.mxu0 0.0
    %105 = vmatprep.subr.mxu0 0.0
    %106 = vmatpush2.msra.mxu0 0.0
    %107 = vmatprep.subr.mxu0 0.0
    %108 = vmatpush2.msra.mxu0 0.0
    %109 = vmatprep.subr.mxu0 0.0
    %110 = vmatpush2.msra.mxu0 0.0
    %111 = vmatprep.subr.mxu0 0.0
    %112 = vmatpush2.msra.mxu0 0.0
    %113 = vmatprep.subr.mxu0 0.0
    %114 = vmatpush2.msra.mxu0 0.0
    %115 = vmatprep.subr.mxu0 0.0
    %116 = vmatpush2.msra.mxu0 0.0
    %117 = vmatprep.subr.mxu0 0.0
    %118 = vmatpush2.msra.mxu0 %v59
    %119 = vmatprep.subr.mxu0 0.0
    %120 = vmatpush2.msra.mxu0 %v44
    %121 = vmatprep.subr.mxu0 0.0
    %122 = vmatpush2.msra.mxu0 %v43
    %123 = vmatprep.subr.mxu0 0.0
    %124 = vmatpush2.msra.mxu0 %v42
    %125 = vmatprep.mubr.f32.mxu0 %v55
    %126 = vmatmul.mubr.f32.gmra.mxu0 %v24
    %v127 = vpop.f32.mrf.mxu0
    %v128 = vadd.f32 %v51, %v127
    %v129 = vpop.f32.mrf.mxu0
    %130 = vdwg.mxu0
    %v131 = vmax.f32 %v128, 0.0
    %v132 = vld [vmem:[%s3] sm:$0xff]
    %v133 = vld [vmem:[%s4] sm:$0x1]
    %v135 = vlaneseq
    %v136 = vshrl.u32 %v135, 7
    %v137 = vsub.s32 0, %v136
    %v138 = vrot.slane %v133, %v137
    %vm140 = vcmask 64512
    %v142 = vsel %vm140, %v131, 0
    %144 = vmatprep.subr.mxu0 0.0
    %145 = vmatpush1.msra.mxu0 0.0
    %146 = vmatprep.subr.mxu0 0.0
    %147 = vmatpush1.msra.mxu0 0.0
    %148 = vmatprep.subr.mxu0 0.0
    %149 = vmatpush1.msra.mxu0 0.0
    %150 = vmatprep.subr.mxu0 0.0
    %151 = vmatpush1.msra.mxu0 0.0
    %152 = vmatprep.subr.mxu0 0.0
    %153 = vmatpush1.msra.mxu0 0.0
    %154 = vmatprep.subr.mxu0 0.0
    %155 = vmatpush1.msra.mxu0 0.0
    %156 = vmatprep.subr.mxu0 0.0
    %157 = vmatpush1.msra.mxu0 0.0
    %158 = vmatprep.subr.mxu0 0.0
    %159 = vmatpush1.msra.mxu0 0.0
    %160 = vmatprep.subr.mxu0 0.0
    %161 = vmatpush1.msra.mxu0 0.0
    %162 = vmatprep.subr.mxu0 0.0
    %163 = vmatpush1.msra.mxu0 0.0
    %164 = vmatprep.subr.mxu0 0.0
    %165 = vmatpush1.msra.mxu0 0.0
    %166 = vmatprep.subr.mxu0 0.0
    %167 = vmatpush1.msra.mxu0 0.0
    %168 = vmatprep.subr.mxu0 0.0
    %169 = vmatpush1.msra.mxu0 0.0
    %170 = vmatprep.subr.mxu0 0.0
    %171 = vmatpush1.msra.mxu0 0.0
    %172 = vmatprep.subr.mxu0 0.0
    %173 = vmatpush1.msra.mxu0 0.0
    %174 = vmatprep.subr.mxu0 0.0
    %175 = vmatpush1.msra.mxu0 %v132
    %176 = vmatprep.subr.mxu0 0.0
    %177 = vmatpush2.msra.mxu0 0.0
    %178 = vmatprep.subr.mxu0 0.0
    %179 = vmatpush2.msra.mxu0 0.0
    %180 = vmatprep.subr.mxu0 0.0
    %181 = vmatpush2.msra.mxu0 0.0
    %182 = vmatprep.subr.mxu0 0.0
    %183 = vmatpush2.msra.mxu0 0.0
    %184 = vmatprep.subr.mxu0 0.0
    %185 = vmatpush2.msra.mxu0 0.0
    %186 = vmatprep.subr.mxu0 0.0
    %187 = vmatpush2.msra.mxu0 0.0
    %188 = vmatprep.subr.mxu0 0.0
    %189 = vmatpush2.msra.mxu0 0.0
    %190 = vmatprep.subr.mxu0 0.0
    %191 = vmatpush2.msra.mxu0 0.0
    %192 = vmatprep.subr.mxu0 0.0
    %193 = vmatpush2.msra.mxu0 0.0
    %194 = vmatprep.subr.mxu0 0.0
    %195 = vmatpush2.msra.mxu0 0.0
    %196 = vmatprep.subr.mxu0 0.0
    %197 = vmatpush2.msra.mxu0 0.0
    %198 = vmatprep.subr.mxu0 0.0
    %199 = vmatpush2.msra.mxu0 0.0
    %200 = vmatprep.subr.mxu0 0.0
    %201 = vmatpush2.msra.mxu0 0.0
    %202 = vmatprep.subr.mxu0 0.0
    %203 = vmatpush2.msra.mxu0 0.0
    %204 = vmatprep.subr.mxu0 0.0
    %205 = vmatpush2.msra.mxu0 0.0
    %206 = vmatprep.subr.mxu0 0.0
    %207 = vmatpush2.msra.mxu0 0.0
    %208 = vmatprep.mubr.f32.mxu0 0.0
    %209 = vmatmul.mubr.f32.gmra.mxu0 %v142
    %v210 = vpop.f32.mrf.mxu0
    %v211 = vadd.f32 %v138, %v210
    %v212 = vpop.f32.mrf.mxu0
    %213 = vdwg.mxu0
    %v214 = vxor.u32 %v211, 2147483648
    %v215 = vmul.f32 %v214, 1.442695
    %v216 = vpow.pop %v215
    %v217 = vadd.f32 %v216, 1.0
    %v218 = vrcp.pop %v217
    %v219 = vmul.f32 1.0, %v218
    %v220 = vld [vmem:[%s5] sm:$0xff]
    %v221 = vld [vmem:[%s5 + $0x8] sm:$0xff]
    %v223 = vsel %vm140, %v219, 0
    %225 = vmatprep.subr.mxu0 0.0
    %226 = vmatpush1.msra.mxu0 0.0
    %227 = vmatprep.subr.mxu0 0.0
    %228 = vmatpush1.msra.mxu0 0.0
    %229 = vmatprep.subr.mxu0 0.0
    %230 = vmatpush1.msra.mxu0 0.0
    %231 = vmatprep.subr.mxu0 0.0
    %232 = vmatpush1.msra.mxu0 0.0
    %233 = vmatprep.subr.mxu0 0.0
    %234 = vmatpush1.msra.mxu0 0.0
    %235 = vmatprep.subr.mxu0 0.0
    %236 = vmatpush1.msra.mxu0 0.0
    %237 = vmatprep.subr.mxu0 0.0
    %238 = vmatpush1.msra.mxu0 0.0
    %239 = vmatprep.subr.mxu0 0.0
    %240 = vmatpush1.msra.mxu0 0.0
    %241 = vmatprep.subr.mxu0 0.0
    %242 = vmatpush1.msra.mxu0 0.0
    %243 = vmatprep.subr.mxu0 0.0
    %244 = vmatpush1.msra.mxu0 0.0
    %245 = vmatprep.subr.mxu0 0.0
    %246 = vmatpush1.msra.mxu0 0.0
    %247 = vmatprep.subr.mxu0 0.0
    %248 = vmatpush1.msra.mxu0 0.0
    %249 = vmatprep.subr.mxu0 0.0
    %250 = vmatpush1.msra.mxu0 0.0
    %251 = vmatprep.subr.mxu0 0.0
    %252 = vmatpush1.msra.mxu0 0.0
    %253 = vmatprep.subr.mxu0 0.0
    %254 = vmatpush1.msra.mxu0 0.0
    %255 = vmatprep.subr.mxu0 %v221
    %256 = vmatpush1.msra.mxu0 %v220
    %257 = vmatprep.subr.mxu0 0.0
    %258 = vmatpush2.msra.mxu0 0.0
    %259 = vmatprep.subr.mxu0 0.0
    %260 = vmatpush2.msra.mxu0 0.0
    %261 = vmatprep.subr.mxu0 0.0
    %262 = vmatpush2.msra.mxu0 0.0
    %263 = vmatprep.subr.mxu0 0.0
    %264 = vmatpush2.msra.mxu0 0.0
    %265 = vmatprep.subr.mxu0 0.0
    %266 = vmatpush2.msra.mxu0 0.0
    %267 = vmatprep.subr.mxu0 0.0
    %268 = vmatpush2.msra.mxu0 0.0
    %269 = vmatprep.subr.mxu0 0.0
    %270 = vmatpush2.msra.mxu0 0.0
    %271 = vmatprep.subr.mxu0 0.0
    %272 = vmatpush2.msra.mxu0 0.0
    %273 = vmatprep.subr.mxu0 0.0
    %274 = vmatpush2.msra.mxu0 0.0
    %275 = vmatprep.subr.mxu0 0.0
    %276 = vmatpush2.msra.mxu0 0.0
    %277 = vmatprep.subr.mxu0 0.0
    %278 = vmatpush2.msra.mxu0 0.0
    %279 = vmatprep.subr.mxu0 0.0
    %280 = vmatpush2.msra.mxu0 0.0
    %281 = vmatprep.subr.mxu0 0.0
    %282 = vmatpush2.msra.mxu0 0.0
    %283 = vmatprep.subr.mxu0 0.0
    %284 = vmatpush2.msra.mxu0 0.0
    %285 = vmatprep.subr.mxu0 0.0
    %286 = vmatpush2.msra.mxu0 0.0
    %287 = vmatprep.subr.mxu0 0.0
    %288 = vmatpush2.msra.mxu0 0.0
    %289 = vmatprep.mubr.f32.mxu0 0.0
    %290 = vmatmul.mubr.f32.gmra.mxu0 %v223
    %v291 = vpop.f32.mrf.mxu0
    %v292 = vadd.f32 0.0, %v291
    %v293 = vpop.f32.mrf.mxu0
    %v294 = vadd.f32 0.0, %v293
    %295 = vdwg.mxu0
    %v296 = vmul.f32 %v24, %v292
    %v297 = vmul.f32 %v25, %v294
    %298 = vst [vmem:[#allocation2] sm:$0xff] %v296
    %299 = vst.msk [vmem:[#allocation2 + $0x8] sm:$0xff] %vm53, %v297
    // Predicated region
    $region26: #{tpu_custom_call.1} parent=1 // pred_check
      _
    $region27: #{tpu_custom_call.1} parent=1 // pred_check_branch
      %301 = sbr.rel (0) target = $region29
    $region28: #{tpu_custom_call.1} parent=1 // pred_region
      %s303 = ssub.s32 256, 256
      %304 = vsyncadd [#allocation3], %s303
      %s306 = sshll.u32 [#allocation2], 4
      %s307 = int_to_ptr.vmem [resolvable:$true] %s306
      %309 = dma.vmem_to_hbm [thread:$0]  %s307, 256, %s6, [#allocation3]
    $region29: #{tpu_custom_call.1} parent=1 // pred_fallthru
      _
    // Predicated region
    $region30: #{tpu_custom_call.1} parent=1 // pred_check
      _
    $region31: #{tpu_custom_call.1} parent=1 // pred_check_branch
      %311 = sbr.rel (0) target = $region33
    $region32: #{tpu_custom_call.1} parent=1 // pred_region
      %312 = dma.done [#allocation3], 256
    $region33: #{tpu_custom_call.1} parent=1 // pred_fallthru
      _
    %313 = vsyncpa [#allocation3], 1

</llo_original>
